<compile_context>
chip_gen: v7x
topology: tpu7x:2x2x1
jax: 0.10.0
libtpu: 0.0.40
codegen_flags: <defaults>
</compile_context>

<pallas_src>
import numpy as np
import jax
import jax.numpy as jnp
from jax import lax
from jax.experimental import pallas as pl
from jax.experimental.pallas import tpu as pltpu


# ----------------------------- kernels --------------------------------------

def _proj_kernel(x_ref, w_ref, b_ref, o_ref):
    # x_ref: (1, S, D_in)  w_ref: (D_in, D_out)  b_ref: (1, D_out)
    # o_ref: (1, S, D_out)
    y = jnp.dot(x_ref[0], w_ref[...], preferred_element_type=jnp.float32)
    o_ref[0] = (y + b_ref[...]).astype(o_ref.dtype)


def _proj_swap_kernel(x_ref, w_ref, b_ref, o_ref):
    # x_ref: (1, D_in, S) channels-first.  The permute(0, 2, 1) of the PyTorch
    # module is fused into the MXU op by contracting the LHS channel axis
    # directly (no transposed copy ever hits HBM or VMEM).
    y = lax.dot_general(
        x_ref[0], w_ref[...],
        dimension_numbers=(((0,), (0,)), ((), ())),
        preferred_element_type=jnp.float32)          # (S, D_out)
    o_ref[0] = (y + b_ref[...]).astype(o_ref.dtype)


def _swap_only_kernel(x_ref, o_ref):
    # Identity projection + swap_context_channels: pure last-two-dims swap.
    o_ref[0] = x_ref[0].T


# ----------------------------- wrappers --------------------------------------

def _linear_pallas(x, w_t, bias, *, swap):
    """y[b] = (x[b].T if swap else x[b]) @ w_t + bias, per batch row."""
    B = x.shape[0]
    if swap:
        _, d_in, S = x.shape
        x_block = (1, d_in, S)
        kernel = _proj_swap_kernel
    else:
        _, S, d_in = x.shape
        x_block = (1, S, d_in)
        kernel = _proj_kernel
    d_out = w_t.shape[1]

    return pl.pallas_call(
        kernel,
        grid=(B,),
        out_shape=jax.ShapeDtypeStruct((B, S, d_out), x.dtype),
        in_specs=[
            pl.BlockSpec(x_block, lambda b: (b, 0, 0)),
            pl.BlockSpec((d_in, d_out), lambda b: (0, 0)),   # weight: resident
            pl.BlockSpec((1, d_out), lambda b: (0, 0)),      # bias:   resident
        ],
        out_specs=pl.BlockSpec((1, S, d_out), lambda b: (b, 0, 0)),
        compiler_params=pltpu.CompilerParams(
            dimension_semantics=("parallel",)),
    )(x, w_t, bias)


def _swap_pallas(x):
    """permute(0, 2, 1) for the Identity-projection + swap path."""
    B, d, S = x.shape
    return pl.pallas_call(
        _swap_only_kernel,
        grid=(B,),
        out_shape=jax.ShapeDtypeStruct((B, S, d), x.dtype),
        in_specs=[pl.BlockSpec((1, d, S), lambda b: (b, 0, 0))],
        out_specs=pl.BlockSpec((1, S, d), lambda b: (b, 0, 0)),
        compiler_params=pltpu.CompilerParams(
            dimension_semantics=("parallel",)),
    )(x)


# ----------------------------- module ----------------------------------------

class TextEmbeddingsAdapter:
    """JAX/Pallas equivalent of xdiffusion's TextEmbeddingsAdapter."""

    def __init__(self, swap_context_channels: bool = False,
                 input_projection_dim: int = -1,
                 output_projection_dim: int = -1,
                 *, key=None, param_dtype=jnp.float32, **kwargs):
        self._swap_context_channels = bool(swap_context_channels)
        self._has_projection = (output_projection_dim > 0
                                and input_projection_dim > 0)
        if self._has_projection:
            if key is None:
                key = jax.random.PRNGKey(0)
            kw, kb = jax.random.split(key)
            bound = 1.0 / float(np.sqrt(input_projection_dim))
            # torch.nn.Linear default init: U(-1/sqrt(fan_in), 1/sqrt(fan_in)).
            # Weight stored pre-transposed [D_in, D_out] -> D_out on lanes.
            self.weight_t = jax.random.uniform(
                kw, (input_projection_dim, output_projection_dim),
                param_dtype, -bound, bound)
            self.bias = jax.random.uniform(
                kb, (1, output_projection_dim), param_dtype, -bound, bound)

    def forward(self, context: dict):
        x = context["text_embeddings"]
        if self._has_projection:
            return _linear_pallas(x, self.weight_t, self.bias,
                                  swap=self._swap_context_channels)
        if self._swap_context_channels:
            return _swap_pallas(x)
        return x  # Identity projection + no swap: pure pass-through.


# ----------------------------- self-test --------------------------------------

if __name__ == "__main__":
    key = jax.random.PRNGKey(0)
    kx, kx2, kparam = jax.random.split(key, 3)

    B, S, D_IN, D_OUT = 2, 8, 32, 128

    # path 1: swap_context_channels=True + Linear projection
    x_cf = jax.random.normal(kx, (B, D_IN, S), jnp.float32)   # channels-first
    adapter = TextEmbeddingsAdapter(swap_context_channels=True,
                                    input_projection_dim=D_IN,
                                    output_projection_dim=D_OUT,
                                    key=kparam)
    y = jax.block_until_ready(adapter.forward({"text_embeddings": x_cf}))
    ref = (np.transpose(np.asarray(x_cf), (0, 2, 1))
           @ np.asarray(adapter.weight_t) + np.asarray(adapter.bias))
    np.testing.assert_allclose(np.asarray(y), ref, rtol=1e-5, atol=1e-5)

    # path 2: no swap + Linear projection
    x_cl = jax.random.normal(kx2, (B, S, D_IN), jnp.float32)  # channels-last
    adapter2 = TextEmbeddingsAdapter(swap_context_channels=False,
                                     input_projection_dim=D_IN,
                                     output_projection_dim=D_OUT,
                                     key=kparam)
    y2 = jax.block_until_ready(adapter2.forward({"text_embeddings": x_cl}))
    ref2 = (np.asarray(x_cl) @ np.asarray(adapter2.weight_t)
            + np.asarray(adapter2.bias))
    np.testing.assert_allclose(np.asarray(y2), ref2, rtol=1e-5, atol=1e-5)

    # path 3: swap_context_channels=True + Identity projection
    adapter3 = TextEmbeddingsAdapter(swap_context_channels=True)
    y3 = jax.block_until_ready(adapter3.forward({"text_embeddings": x_cf}))
    np.testing.assert_array_equal(
        np.asarray(y3), np.transpose(np.asarray(x_cf), (0, 2, 1)))

    print("KERNEL_OK")
</pallas_src>

<mosaic_0001>
module attributes {stable_mosaic.version = 11 : i64} {
  func.func @_proj_swap_kernel(%arg0: i32, %arg1: memref<1x32x8xf32, #tpu.memory_space<vmem>>, %arg2: memref<32x128xf32, #tpu.memory_space<vmem>>, %arg3: memref<1x128xf32, #tpu.memory_space<vmem>>, %arg4: memref<1x8x128xf32, #tpu.memory_space<vmem>>) attributes {dimension_semantics = [#tpu.dimension_semantics<parallel>], iteration_bounds = array<i64: 2>, scalar_prefetch = 0 : i64, scratch_operands = 0 : i64, tpu.core_type = #tpu.core_type<tc>, window_params = [{transform_indices = @transform_0, window_bounds = array<i64: 1, 32, 8>}, {pipeline_mode = #tpu.pipeline_mode<synchronous>, transform_indices = @transform_1, window_bounds = array<i64: 32, 128>}, {pipeline_mode = #tpu.pipeline_mode<synchronous>, transform_indices = @transform_2, window_bounds = array<i64: 1, 128>}, {transform_indices = @transform_3, window_bounds = array<i64: 1, 8, 128>}]} {
    %c0 = arith.constant 0 : index
    %c0_0 = arith.constant 0 : index
    %c0_1 = arith.constant 0 : index
    %0 = vector.load %arg1[%c0, %c0_0, %c0_1] : memref<1x32x8xf32, #tpu.memory_space<vmem>>, vector<1x32x8xf32>
    %1 = vector.shape_cast %0 : vector<1x32x8xf32> to vector<32x8xf32>
    %c0_2 = arith.constant 0 : index
    %c0_3 = arith.constant 0 : index
    %2 = vector.load %arg2[%c0_2, %c0_3] : memref<32x128xf32, #tpu.memory_space<vmem>>, vector<32x128xf32>
    %cst = arith.constant dense<0.000000e+00> : vector<8x128xf32>
    %3 = tpu.matmul %1, %2, %cst {dimension_numbers = #tpu.dot_dimension_numbers<[0], [0], [1], [1], [0, 1, 1, 1], [], []>} : vector<32x8xf32>, vector<32x128xf32>, vector<8x128xf32> -> vector<8x128xf32>
    %c0_4 = arith.constant 0 : index
    %c0_5 = arith.constant 0 : index
    %4 = vector.load %arg3[%c0_4, %c0_5] : memref<1x128xf32, #tpu.memory_space<vmem>>, vector<1x128xf32>
    %5 = vector.broadcast %4 : vector<1x128xf32> to vector<8x128xf32>
    %6 = arith.addf %3, %5 : vector<8x128xf32>
    %c0_6 = arith.constant 0 : index
    %c0_7 = arith.constant 0 : index
    %c0_8 = arith.constant 0 : index
    %7 = vector.load %arg4[%c0_6, %c0_7, %c0_8] : memref<1x8x128xf32, #tpu.memory_space<vmem>>, vector<1x8x128xf32>
    %8 = vector.shape_cast %7 : vector<1x8x128xf32> to vector<8x128xf32>
    %9 = vector.shape_cast %6 : vector<8x128xf32> to vector<1x8x128xf32>
    tpu.vector_store %arg4[%c0_6, %c0_7, %c0_8], %9 {strides = array<i32>} : memref<1x8x128xf32, #tpu.memory_space<vmem>>, vector<1x8x128xf32>,
    return
  }
  func.func @transform_0(%arg0: i32) -> (i32, i32, i32) {
    %c0_i32 = arith.constant 0 : i32
    %c0_i32_0 = arith.constant 0 : i32
    %c0_i32_1 = arith.constant 0 : i32
    return %arg0, %c0_i32, %c0_i32_0 : i32, i32, i32
  }
  func.func @transform_1(%arg0: i32) -> (i32, i32) {
    %c0_i32 = arith.constant 0 : i32
    %c0_i32_0 = arith.constant 0 : i32
    %c0_i32_1 = arith.constant 0 : i32
    return %c0_i32, %c0_i32_0 : i32, i32
  }
  func.func @transform_2(%arg0: i32) -> (i32, i32) {
    %c0_i32 = arith.constant 0 : i32
    %c0_i32_0 = arith.constant 0 : i32
    %c0_i32_1 = arith.constant 0 : i32
    return %c0_i32, %c0_i32_0 : i32, i32
  }
  func.func @transform_3(%arg0: i32) -> (i32, i32, i32) {
    %c0_i32 = arith.constant 0 : i32
    %c0_i32_0 = arith.constant 0 : i32
    %c0_i32_1 = arith.constant 0 : i32
    return %arg0, %c0_i32, %c0_i32_0 : i32, i32, i32
  }
}

</mosaic_0001>

<llo_original>
// kernel: tpu_custom_call.1
$region0: #{tpu_custom_call.1}
  #allocation0 [shape = 'u32[]', space=smem, size = 0x4, offset = 0x4, fixed_abs, tag = 'smem constant byte address 0x4 - core index']
  #allocation1 [shape = 'u32[144,128]{1,0:T(1,128)}', space=vmem, size = 0x12000, scoped, tag = 'internal scratch']
  %s0 = inlined_call_operand.vmem [shape: f32[2,32,8], index: 0, kind: input, shape index: {}]
  %s1 = inlined_call_operand.vmem [shape: f32[32,128], index: 1, kind: input, shape index: {}]
  %s2 = inlined_call_operand.vmem [shape: f32[1,128], index: 2, kind: input, shape index: {}]
  %s3 = inlined_call_operand.hbm [shape: f32[2,8,128], index: 3, kind: output, shape index: {}]
  %s4 = sld [smem:[#allocation0]]
  $region45: #{tpu_custom_call.1} parent=0
    _
  %s6 = ssub.s32 1, %s4
  %s7 = scalar_select 0, %s6, %s4
  $region1: #{tpu_custom_call.1} parent=0
    #allocation2 [shape = 'u8[8192]{0}', space=vmem, size = 0x2000, scoped, tag = 'output window, operand 0']
    #allocation3 [shape = 's32[2]{0}', space=sflag, size = 0x8, scoped, tag = 'scoped memory for tpu_custom_call.1']
    %8 = vsyncpa [#allocation3], 0
    %s9 = scalar_lea.sflag [#allocation3], 1
    %10 = vsyncpa %s9, 0
    loop: start=0, step=1, limit=4
    $region2: #{tpu_custom_call.1} parent=1 // loop_pre_header
      _
    $region3: #{tpu_custom_call.1} parent=1 // loop_header
      %s12 = sphi 0, %s16
      %p13 = scmp.ge.s32.totalorder %s12, 4
      %s22 = sphi 0, %s24
      %s25 = sphi 0, %s22
      %s26 = sphi 0, %s25
      %s42 = sphi 0, %s26
      %s46 = sphi 0, %s46
      %s48 = sphi 0, %s46
      %s49 = sphi 0, %s48
      %s63 = sphi 0, %s49
      %s67 = sphi 0, %s67
      %s69 = sphi 0, %s67
      %s70 = sphi 0, %s69
      %s84 = sphi 0, %s70
      %s90 = sphi 0, %s92
      %s93 = sphi 0, %s90
      %s94 = sphi 0, %s93
      %s110 = sphi 0, %s94
    $region4: #{tpu_custom_call.1} parent=1 // loop_header_branch
      %15 = sbr.rel (%p13) target = $region8
    $region5: #{tpu_custom_call.1} parent=1 // loop_body
      %s17 = ssub.s32 %s12, 1
      %s18 = ssub.s32 %s12, 2
      %s19 = sadd.s32 %s12, 1
      %s20 = ssub.s32 %s12, %s19
      %p21 = scmp.eq.s32.totalorder %s20, 0
      %s23 = sadd.s32 %s22, 1
      %s24 = scalar_select %p21, %s22, %s23
      %p27 = pneg %p21
      %p28 = scmp.eq.s32.totalorder %s12, 1
      %p29 = por %p27, %p28
      %p30 = scmp.ne.s32.totalorder %s22, %s25
      %p31 = scmp.eq.s32.totalorder %s12, 0
      %p32 = por %p30, %p31
      %p33 = scmp.ne.s32.totalorder %s22, %s25
      %p34 = scmp.eq.s32.totalorder %s17, 1
      %p35 = por %p33, %p34
      %p36 = scmp.ne.s32.totalorder %s25, %s26
      %p37 = scmp.eq.s32.totalorder %s17, 0
      %p38 = por %p36, %p37
      %p39 = scmp.ne.s32.totalorder %s25, %s26
      %p40 = scmp.eq.s32.totalorder %s18, 1
      %p41 = por %p39, %p40
      %p43 = scmp.ne.s32.totalorder %s26, %s42
      %p44 = scmp.eq.s32.totalorder %s18, 0
      %p45 = por %p43, %p44
      %s47 = sadd.s32 %s46, 1
      %p50 = scmp.eq.s32.totalorder %s12, 1
      %p51 = scmp.ne.s32.totalorder %s46, %s48
      %p52 = scmp.eq.s32.totalorder %s12, 0
      %p53 = por %p51, %p52
      %p54 = scmp.ne.s32.totalorder %s46, %s48
      %p55 = scmp.eq.s32.totalorder %s17, 1
      %p56 = por %p54, %p55
      %p57 = scmp.ne.s32.totalorder %s48, %s49
      %p58 = scmp.eq.s32.totalorder %s17, 0
      %p59 = por %p57, %p58
      %p60 = scmp.ne.s32.totalorder %s48, %s49
      %p61 = scmp.eq.s32.totalorder %s18, 1
      %p62 = por %p60, %p61
      %p64 = scmp.ne.s32.totalorder %s49, %s63
      %p65 = scmp.eq.s32.totalorder %s18, 0
      %p66 = por %p64, %p65
      %s68 = sadd.s32 %s67, 1
      %p71 = scmp.eq.s32.totalorder %s12, 1
      %p72 = scmp.ne.s32.totalorder %s67, %s69
      %p73 = scmp.eq.s32.totalorder %s12, 0
      %p74 = por %p72, %p73
      %p75 = scmp.ne.s32.totalorder %s67, %s69
      %p76 = scmp.eq.s32.totalorder %s17, 1
      %p77 = por %p75, %p76
      %p78 = scmp.ne.s32.totalorder %s69, %s70
      %p79 = scmp.eq.s32.totalorder %s17, 0
      %p80 = por %p78, %p79
      %p81 = scmp.ne.s32.totalorder %s69, %s70
      %p82 = scmp.eq.s32.totalorder %s18, 1
      %p83 = por %p81, %p82
      %p85 = scmp.ne.s32.totalorder %s70, %s84
      %p86 = scmp.eq.s32.totalorder %s18, 0
      %p87 = por %p85, %p86
      %s88 = ssub.s32 %s12, %s19
      %p89 = scmp.eq.s32.totalorder %s88, 0
      %s91 = sadd.s32 %s90, 1
      %s92 = scalar_select %p89, %s90, %s91
      %p95 = pneg %p89
      %p96 = scmp.eq.s32.totalorder %s12, 1
      %p97 = por %p95, %p96
      %p98 = scmp.ne.s32.totalorder %s90, %s93
      %p99 = scmp.eq.s32.totalorder %s12, 0
      %p100 = por %p98, %p99
      %p101 = scmp.ne.s32.totalorder %s90, %s93
      %p102 = scmp.eq.s32.totalorder %s17, 1
      %p103 = por %p101, %p102
      %p104 = scmp.ne.s32.totalorder %s93, %s94
      %p105 = scmp.eq.s32.totalorder %s17, 0
      %p106 = por %p104, %p105
      %p107 = scmp.ne.s32.totalorder %s93, %s94
      %p108 = scmp.eq.s32.totalorder %s18, 1
      %p109 = por %p107, %p108
      %p111 = scmp.ne.s32.totalorder %s94, %s110
      %p112 = scmp.eq.s32.totalorder %s18, 0
      %p113 = por %p111, %p112
      %p114 = scmp.le.s32.totalorder 1, %s12
      %p115 = scmp.lt.s32.totalorder %s12, 3
      %p116 = pnand %p114, %p115
      %p117 = pneg %p116
      // Predicated region
      $region9: #{tpu_custom_call.1} parent=5 // pred_check
        _
      $region10: #{tpu_custom_call.1} parent=5 // pred_check_branch
        %119 = sbr.rel (%p116) target = $region12
      $region11: #{tpu_custom_call.1} parent=5 // pred_region
        %s120 = ssub.s32 %s12, 1
        // Predicated region
        $region13: #{tpu_custom_call.1} parent=11 // pred_check
          %p121 = pneg %p59
        $region14: #{tpu_custom_call.1} parent=11 // pred_check_branch
          %123 = sbr.rel (%p121) target = $region16
        $region15: #{tpu_custom_call.1} parent=11 // pred_region
          _
        $region16: #{tpu_custom_call.1} parent=11 // pred_fallthru
          _
        // Predicated region
        $region17: #{tpu_custom_call.1} parent=11 // pred_check
          %p124 = pneg %p80
        $region18: #{tpu_custom_call.1} parent=11 // pred_check_branch
          %126 = sbr.rel (%p124) target = $region20
        $region19: #{tpu_custom_call.1} parent=11 // pred_region
          _
        $region20: #{tpu_custom_call.1} parent=11 // pred_fallthru
          _
      $region12: #{tpu_custom_call.1} parent=5 // pred_fallthru
        _
      %p127 = scmp.lt.s32.totalorder %s12, 2
      // Predicated region
      $region21: #{tpu_custom_call.1} parent=5 // pred_check
        %p128 = pneg %p127
      $region22: #{tpu_custom_call.1} parent=5 // pred_check_branch
        %130 = sbr.rel (%p128) target = $region24
      $region23: #{tpu_custom_call.1} parent=5 // pred_region
        // Predicated region
        $region25: #{tpu_custom_call.1} parent=23 // pred_check
          %p131 = pneg %p32
        $region26: #{tpu_custom_call.1} parent=23 // pred_check_branch
          %133 = sbr.rel (%p131) target = $region28
        $region27: #{tpu_custom_call.1} parent=23 // pred_region
          %p134 = scmp.lt.s32.totalorder %s12, 1
          %s135 = scalar_select %p134, %s12, 1
          %s136 = smul.addr %s135, 4
          %s137 = smul.addr %s136, 8
          %s138 = scalar_lea.vmem %s0, %s137
        $region28: #{tpu_custom_call.1} parent=23 // pred_fallthru
          _
      $region24: #{tpu_custom_call.1} parent=5 // pred_fallthru
        _
      %p139 = scmp.le.s32.totalorder 1, %s12
      %p140 = scmp.lt.s32.totalorder %s12, 3
      %p141 = pnand %p139, %p140
      %p142 = pneg %p141
      // Predicated region
      $region29: #{tpu_custom_call.1} parent=5 // pred_check
        _
      $region30: #{tpu_custom_call.1} parent=5 // pred_check_branch
        %144 = sbr.rel (%p141) target = $region32
      $region31: #{tpu_custom_call.1} parent=5 // pred_region
        %s145 = ssub.s32 %s12, 1
        %p146 = scmp.lt.s32.totalorder %s17, 1
        %s147 = scalar_select %p146, %s17, 1
        %s148 = smul.addr %s147, 4
        %s149 = smul.addr %s148, 8
        %s150 = scalar_lea.vmem %s0, %s149
        %p151 = pneg %p38
        %p152 = pneg %p35
        %p153 = pneg %p59
        %p154 = pneg %p56
        %p155 = pneg %p80
        %p156 = pneg %p77
        %p157 = pneg %p106
        %p158 = pneg %p103
        %s159 = sand.u32 %s93, 1
        %s160 = scalar_lea.sflag [#allocation3], %s159
        %s161 = sand.u32 %s93, 1
        %s162 = smul.addr %s161, 8
        %s163 = scalar_lea.vmem [#allocation2], %s162
        %p164 = scmp.lt.s32.totalorder %s17, 1
        %s165 = scalar_select %p164, %s17, 1
        %s166 = smul.addr %s165, 4
        %s167 = smul.addr %s166, 8
        %s168 = scalar_lea.vmem %s0, %s167
        %v169 = vld [vmem:[%s168] sm:$0xff]
        %v170 = vld [vmem:[%s168 + $0x8] sm:$0xff]
        %v171 = vld [vmem:[%s168 + $0x10] sm:$0xff]
        %v172 = vld [vmem:[%s168 + $0x18] sm:$0xff]
        %v173 = vld [vmem:[%s1] sm:$0xff]
        %v174 = vld [vmem:[%s1 + $0x8] sm:$0xff]
        %v175 = vld [vmem:[%s1 + $0x10] sm:$0xff]
        %v176 = vld [vmem:[%s1 + $0x18] sm:$0xff]
        %v177 = vld [vmem:[%s2] sm:$0x1]
        %v179 = vlaneseq
        %v180 = vshrl.u32 %v179, 7
        %v181 = vsub.s32 0, %v180
        %v182 = vrot.slane %v177, %v181
        %184 = vxpose.xlu0.b32.start [1/16] %v169, 128
        %185 = vxpose.xlu0.b32.cont [2/16] %v170, 128
        %186 = vxpose.xlu0.b32.cont [3/16] %v171, 128
        %187 = vxpose.xlu0.b32.cont [4/16] %v172, 128
        %188 = vxpose.xlu0.b32.cont [5/16] 0.0, 128
        %189 = vxpose.xlu0.b32.cont [6/16] 0.0, 128
        %190 = vxpose.xlu0.b32.cont [7/16] 0.0, 128
        %191 = vxpose.xlu0.b32.cont [8/16] 0.0, 128
        %192 = vxpose.xlu0.b32.cont [9/16] 0.0, 128
        %193 = vxpose.xlu0.b32.cont [10/16] 0.0, 128
        %194 = vxpose.xlu0.b32.cont [11/16] 0.0, 128
        %195 = vxpose.xlu0.b32.cont [12/16] 0.0, 128
        %196 = vxpose.xlu0.b32.cont [13/16] 0.0, 128
        %197 = vxpose.xlu0.b32.cont [14/16] 0.0, 128
        %198 = vxpose.xlu0.b32.cont [15/16] 0.0, 128
        %199 = vxpose.xlu0.b32.end [16/16] 0.0, 128
        %v200 = vpop.trf.xlu0
        %v201 = vpop.trf.xlu0
        %v202 = vpop.trf.xlu0
        %v203 = vpop.trf.xlu0
        %v204 = vpop.trf.xlu0
        %v205 = vpop.trf.xlu0
        %v206 = vpop.trf.xlu0
        %v207 = vpop.trf.xlu0
        %v208 = vpop.trf.xlu0
        %v209 = vpop.trf.xlu0
        %v210 = vpop.trf.xlu0
        %v211 = vpop.trf.xlu0
        %v212 = vpop.trf.xlu0
        %v213 = vpop.trf.xlu0
        %v214 = vpop.trf.xlu0
        %v215 = vpop.trf.xlu0
        %vm216 = vcmask 261120
        %v218 = vsel %vm216, %v200, 0
        %220 = vmatprep.subr.mxu0 0.0
        %221 = vmatpush1.msra.mxu0 %v173
        %222 = vmatprep.subr.mxu0 0.0
        %223 = vmatpush1.msra.mxu0 %v174
        %224 = vmatprep.subr.mxu0 0.0
        %225 = vmatpush1.msra.mxu0 %v175
        %226 = vmatprep.subr.mxu0 0.0
        %227 = vmatpush1.msra.mxu0 %v176
        %228 = vmatprep.subr.mxu0 0.0
        %229 = vmatpush1.msra.mxu0 0.0
        %230 = vmatprep.subr.mxu0 0.0
        %231 = vmatpush1.msra.mxu0 0.0
        %232 = vmatprep.subr.mxu0 0.0
        %233 = vmatpush1.msra.mxu0 0.0
        %234 = vmatprep.subr.mxu0 0.0
        %235 = vmatpush1.msra.mxu0 0.0
        %236 = vmatprep.subr.mxu0 0.0
        %237 = vmatpush1.msra.mxu0 0.0
        %238 = vmatprep.subr.mxu0 0.0
        %239 = vmatpush1.msra.mxu0 0.0
        %240 = vmatprep.subr.mxu0 0.0
        %241 = vmatpush1.msra.mxu0 0.0
        %242 = vmatprep.subr.mxu0 0.0
        %243 = vmatpush1.msra.mxu0 0.0
        %244 = vmatprep.subr.mxu0 0.0
        %245 = vmatpush1.msra.mxu0 0.0
        %246 = vmatprep.subr.mxu0 0.0
        %247 = vmatpush1.msra.mxu0 0.0
        %248 = vmatprep.subr.mxu0 0.0
        %249 = vmatpush1.msra.mxu0 0.0
        %250 = vmatprep.subr.mxu0 0.0
        %251 = vmatpush1.msra.mxu0 0.0
        %252 = vmatprep.subr.mxu0 0.0
        %253 = vmatpush1.msra.mxu0 0.0
        %254 = vmatprep.subr.mxu0 0.0
        %255 = vmatpush1.msra.mxu0 0.0
        %256 = vmatprep.subr.mxu0 0.0
        %257 = vmatpush1.msra.mxu0 0.0
        %258 = vmatprep.subr.mxu0 0.0
        %259 = vmatpush1.msra.mxu0 0.0
        %260 = vmatprep.subr.mxu0 0.0
        %261 = vmatpush1.msra.mxu0 0.0
        %262 = vmatprep.subr.mxu0 0.0
        %263 = vmatpush1.msra.mxu0 0.0
        %264 = vmatprep.subr.mxu0 0.0
        %265 = vmatpush1.msra.mxu0 0.0
        %266 = vmatprep.subr.mxu0 0.0
        %267 = vmatpush1.msra.mxu0 0.0
        %268 = vmatprep.subr.mxu0 0.0
        %269 = vmatpush1.msra.mxu0 0.0
        %270 = vmatprep.subr.mxu0 0.0
        %271 = vmatpush1.msra.mxu0 0.0
        %272 = vmatprep.subr.mxu0 0.0
        %273 = vmatpush1.msra.mxu0 0.0
        %274 = vmatprep.subr.mxu0 0.0
        %275 = vmatpush1.msra.mxu0 0.0
        %276 = vmatprep.subr.mxu0 0.0
        %277 = vmatpush1.msra.mxu0 0.0
        %278 = vmatprep.subr.mxu0 0.0
        %279 = vmatpush1.msra.mxu0 0.0
        %280 = vmatprep.subr.mxu0 0.0
        %281 = vmatpush1.msra.mxu0 0.0
        %282 = vmatprep.subr.mxu0 0.0
        %283 = vmatpush1.msra.mxu0 0.0
        %284 = vmatprep.mubr.f32.mxu0 0.0
        %285 = vmatmul.mubr.f32.gmra.mrb[0].mxu0 %v218
        %v286 = vpop.f32.mrb[0].mxu0
        %v287 = vadd.f32 %v182, %v286
        %v288 = vpop.f32.mrb[0].mxu0
        %289 = vdwg.mxu0
        %290 = vst [vmem:[%s163] sm:$0xff] %v287
        %s291 = sand.u32 %s93, 1
        %s292 = scalar_lea.sflag [#allocation3], %s291
        %s293 = sand.u32 %s93, 1
        %s294 = smul.addr %s293, 8
        %s295 = scalar_lea.vmem [#allocation2], %s294
        // Predicated region
        $region33: #{tpu_custom_call.1} parent=31 // pred_check
          %p296 = pneg %p103
        $region34: #{tpu_custom_call.1} parent=31 // pred_check_branch
          %298 = sbr.rel (%p296) target = $region36
        $region35: #{tpu_custom_call.1} parent=31 // pred_region
          %s300 = ssub.s32 128, 128
          %301 = vsyncadd %s292, %s300
          %s302 = smul.addr %s17, 128
          %s303 = scalar_lea.hbm %s3, %s302
          %s305 = sshll.u32 %s295, 4
          %s306 = int_to_ptr.vmem [resolvable:$true] %s305
          %308 = dma.vmem_to_hbm [thread:$0]  %s306, 128, %s303, %s292
        $region36: #{tpu_custom_call.1} parent=31 // pred_fallthru
          _
      $region32: #{tpu_custom_call.1} parent=5 // pred_fallthru
        _
      %p309 = scmp.le.s32.totalorder 2, %s12
      // Predicated region
      $region37: #{tpu_custom_call.1} parent=5 // pred_check
        %p310 = pneg %p309
      $region38: #{tpu_custom_call.1} parent=5 // pred_check_branch
        %312 = sbr.rel (%p310) target = $region40
      $region39: #{tpu_custom_call.1} parent=5 // pred_region
        %s313 = ssub.s32 %s12, 2
        // Predicated region
        $region41: #{tpu_custom_call.1} parent=39 // pred_check
          %p314 = pneg %p109
        $region42: #{tpu_custom_call.1} parent=39 // pred_check_branch
          %316 = sbr.rel (%p314) target = $region44
        $region43: #{tpu_custom_call.1} parent=39 // pred_region
          %s317 = sand.u32 %s94, 1
          %s318 = scalar_lea.sflag [#allocation3], %s317
          %s319 = sand.u32 %s94, 1
          %s320 = smul.addr %s319, 8
          %s321 = scalar_lea.vmem [#allocation2], %s320
          %322 = dma.done %s318, 128
        $region44: #{tpu_custom_call.1} parent=39 // pred_fallthru
          _
      $region40: #{tpu_custom_call.1} parent=5 // pred_fallthru
        _
    $region6: #{tpu_custom_call.1} parent=1 // loop_footer
      %s16 = sadd.s32 1, %s12
    $region7: #{tpu_custom_call.1} parent=1 // loop_footer_branch
      %11 = sbr.rel target = $region3
    $region8: #{tpu_custom_call.1} parent=1 // loop_exit
      _
    %323 = vsyncpa [#allocation3], 1
    %s324 = scalar_lea.sflag [#allocation3], 1
    %325 = vsyncpa %s324, 1

</llo_original>
